<compile_context>
chip_gen: v7x
topology: tpu7x:2x2x1
jax: 0.10.0
libtpu: 0.0.40
codegen_flags: <defaults>
</compile_context>

<pallas_src>
import math

import jax
import jax.numpy as jnp
from jax import lax
from jax.experimental import pallas as pl
from jax.experimental.pallas import tpu as pltpu

_INV_SQRT2 = 0.7071067811865476
_SQRT_2_OVER_PI = 0.7978845608028654

_MAX_TILE_ROWS = 1024          # measured sweet spot for mem-bound elementwise ops
_FEATURE_TILE_CAP = 2048       # cap per-step feature width (lane-dense multiple of 128)
_VMEM_BUFFER_BUDGET = 28 << 20 # double-buffered block budget (safe on v5e/v6e/v7x)
_VMEM_LIMIT_BYTES = 48 << 20   # explicit scoped-VMEM limit (< v7x 64 MiB physical)


def _gelu_f32(x2f, approximate):
    if approximate:
        # tanh approximation (EUP slot) — optional fast path for v7x.
        inner = jnp.float32(_SQRT_2_OVER_PI) * (
            x2f + jnp.float32(0.044715) * x2f * x2f * x2f
        )
        return 0.5 * x2f * (1.0 + jnp.tanh(inner))
    # Exact erf-based GELU (matches torch.nn.functional.gelu default).
    return 0.5 * x2f * (1.0 + lax.erf(x2f * jnp.float32(_INV_SQRT2)))


def _make_geglu_kernel(approximate):
    def kernel(x1_ref, x2_ref, o_ref):
        x1 = x1_ref[...].astype(jnp.float32)
        x2 = x2_ref[...].astype(jnp.float32)
        o_ref[...] = (x1 * _gelu_f32(x2, approximate)).astype(o_ref.dtype)

    return kernel


def geglu(x, *, approximate=False,
          max_tile_rows=_MAX_TILE_ROWS,
          vmem_buffer_budget_bytes=_VMEM_BUFFER_BUDGET,
          vmem_limit_bytes=_VMEM_LIMIT_BYTES):
    """x: (..., 2*H). Returns (..., H) = x1 * gelu(x2)."""
    orig_shape = x.shape
    two_h = orig_shape[-1]
    if two_h % 2 != 0:
        raise ValueError("last dim must be even for GEGLU")
    h = two_h // 2
    rows = math.prod(orig_shape[:-1]) if len(orig_shape) > 1 else 1
    final_shape = orig_shape[:-1] + (h,)
    if rows == 0 or h == 0:
        return jnp.zeros(final_shape, dtype=x.dtype)

    x2d = x.reshape(rows, two_h)
    itemsize = jnp.dtype(x.dtype).itemsize

    lane_dense = (h % 128 == 0)
    if lane_dense:
        # Feature tile TH: largest multiple of 128 dividing H, capped.
        th = h
        if th > _FEATURE_TILE_CAP:
            th = 128
            t = _FEATURE_TILE_CAP
            while t >= 128:
                if h % t == 0:
                    th = t
                    break
                t -= 128
        nf = h // th
        out_w = h
        a1, a2 = x2d, x2d                 # same HBM buffer, two block views
        x2_block_offset = nf              # x2 half starts nf feature-blocks in
    else:
        # TODO(synk): ragged H (< or not multiple of 128) pays one XLA split+pad
        # copy to keep the kernel output lane-dense (unmasked stores).
        hp = ((h + 127) // 128) * 128
        a1 = jnp.pad(x2d[:, :h], ((0, 0), (0, hp - h)))
        a2 = jnp.pad(x2d[:, h:], ((0, 0), (0, hp - h)))
        th = hp
        nf = 1
        out_w = hp
        x2_block_offset = 0

    # Row tile: biggest multiple of 8 whose double-buffered footprint
    # (2 inputs + 1 output, x2 buffers each) fits the VMEM buffer budget.
    per_row_bytes = 6 * th * itemsize
    tm = max(8, vmem_buffer_budget_bytes // per_row_bytes)
    tm = min(tm, max_tile_rows)
    tm = max(8, (tm // 8) * 8)
    rows_rounded = ((rows + 7) // 8) * 8
    tm = min(tm, rows_rounded)
    grid_rows = pl.cdiv(rows, tm)

    cost = pl.CostEstimate(
        flops=12 * rows * h,
        transcendentals=rows * h,
        bytes_accessed=3 * rows * h * itemsize,
    )

    out2d = pl.pallas_call(
        _make_geglu_kernel(approximate),
        out_shape=jax.ShapeDtypeStruct((rows, out_w), x.dtype),
        grid_spec=pltpu.PrefetchScalarGridSpec(
            num_scalar_prefetch=0,
            grid=(grid_rows, nf),
            in_specs=[
                pl.BlockSpec((tm, th), lambda i, j: (i, j)),
                pl.BlockSpec((tm, th),
                             lambda i, j, _off=x2_block_offset: (i, j + _off)),
            ],
            out_specs=pl.BlockSpec((tm, th), lambda i, j: (i, j)),
        ),
        compiler_params=pltpu.CompilerParams(
            dimension_semantics=("parallel", "parallel"),
            vmem_limit_bytes=vmem_limit_bytes,
        ),
        cost_estimate=cost,
    )(a1, a2)

    if out_w != h:
        out2d = out2d[:, :h]
    return out2d.reshape(final_shape)


def _geglu_ref(x):
    h = x.shape[-1] // 2
    x1, x2 = x[..., :h], x[..., h:]
    return x1 * jax.nn.gelu(x2, approximate=False)


if __name__ == "__main__":
    key = jax.random.PRNGKey(0)
    k1, k2, k3 = jax.random.split(key, 3)

    # Primary small shape: (batch=2, seq=8, 2*hidden=256) -> lane-dense fast path.
    x_a = jax.random.normal(k1, (2, 8, 256), dtype=jnp.float32)
    out_a = jax.block_until_ready(geglu(x_a))
    ref_a = _geglu_ref(x_a)
    assert out_a.shape == (2, 8, 128), out_a.shape
    assert jnp.allclose(out_a, ref_a, atol=1e-5, rtol=1e-5), float(
        jnp.max(jnp.abs(out_a - ref_a))
    )

    # Row count not a multiple of the row tile -> exercises cdiv grid (no pre-pad copy).
    x_b = jax.random.normal(k2, (3, 5, 256), dtype=jnp.float32)
    out_b = jax.block_until_ready(geglu(x_b))
    ref_b = _geglu_ref(x_b)
    assert out_b.shape == (3, 5, 128), out_b.shape
    assert jnp.allclose(out_b, ref_b, atol=1e-5, rtol=1e-5), float(
        jnp.max(jnp.abs(out_b - ref_b))
    )

    # bf16 input with H not a multiple of 128 -> wrapper split+pad fallback path.
    x_c = jax.random.normal(k3, (4, 6, 120), dtype=jnp.bfloat16)
    out_c = jax.block_until_ready(geglu(x_c))
    ref_c = _geglu_ref(x_c.astype(jnp.float32))
    assert out_c.shape == (4, 6, 60), out_c.shape
    assert jnp.allclose(out_c.astype(jnp.float32), ref_c, atol=2e-2, rtol=2e-2), float(
        jnp.max(jnp.abs(out_c.astype(jnp.float32) - ref_c))
    )

    print("KERNEL_OK")
</pallas_src>

<mosaic_0001>
module attributes {stable_mosaic.version = 11 : i64} {
  func.func @kernel(%arg0: i32, %arg1: i32, %arg2: memref<16x128xf32, #tpu.memory_space<vmem>>, %arg3: memref<16x128xf32, #tpu.memory_space<vmem>>, %arg4: memref<16x128xf32, #tpu.memory_space<vmem>>) attributes {dimension_semantics = [#tpu.dimension_semantics<parallel>, #tpu.dimension_semantics<parallel>], iteration_bounds = array<i64: 1, 1>, scalar_prefetch = 0 : i64, scratch_operands = 0 : i64, tpu.core_type = #tpu.core_type<tc>, window_params = [{transform_indices = @transform_0, window_bounds = array<i64: 16, 128>}, {transform_indices = @transform_1, window_bounds = array<i64: 16, 128>}, {transform_indices = @transform_2, window_bounds = array<i64: 16, 128>}]} {
    %c0 = arith.constant 0 : index
    %c0_0 = arith.constant 0 : index
    %0 = vector.load %arg2[%c0, %c0_0] : memref<16x128xf32, #tpu.memory_space<vmem>>, vector<16x128xf32>
    %c0_1 = arith.constant 0 : index
    %c0_2 = arith.constant 0 : index
    %1 = vector.load %arg3[%c0_1, %c0_2] : memref<16x128xf32, #tpu.memory_space<vmem>>, vector<16x128xf32>
    %cst = arith.constant 5.000000e-01 : f32
    %2 = vector.broadcast %cst : f32 to vector<16x128xf32>
    %3 = arith.mulf %2, %1 : vector<16x128xf32>
    %cst_3 = arith.constant 0.707106769 : f32
    %4 = vector.broadcast %cst_3 : f32 to vector<16x128xf32>
    %5 = arith.mulf %1, %4 : vector<16x128xf32>
    %6 = math.erf %5 : vector<16x128xf32>
    %cst_4 = arith.constant 1.000000e+00 : f32
    %7 = vector.broadcast %cst_4 : f32 to vector<16x128xf32>
    %8 = arith.addf %7, %6 : vector<16x128xf32>
    %9 = arith.mulf %3, %8 : vector<16x128xf32>
    %10 = arith.mulf %0, %9 : vector<16x128xf32>
    %c0_5 = arith.constant 0 : index
    %c0_6 = arith.constant 0 : index
    %11 = vector.load %arg4[%c0_5, %c0_6] : memref<16x128xf32, #tpu.memory_space<vmem>>, vector<16x128xf32>
    tpu.vector_store %arg4[%c0_5, %c0_6], %10 {strides = array<i32>} : memref<16x128xf32, #tpu.memory_space<vmem>>, vector<16x128xf32>,
    return
  }
  func.func @transform_0(%arg0: i32, %arg1: i32) -> (i32, i32) {
    %c0_i32 = arith.constant 0 : i32
    return %arg0, %arg1 : i32, i32
  }
  func.func @transform_1(%arg0: i32, %arg1: i32) -> (i32, i32) {
    %c1_i32 = arith.constant 1 : i32
    %0 = arith.addi %arg1, %c1_i32 : i32
    %c0_i32 = arith.constant 0 : i32
    return %arg0, %0 : i32, i32
  }
  func.func @transform_2(%arg0: i32, %arg1: i32) -> (i32, i32) {
    %c0_i32 = arith.constant 0 : i32
    return %arg0, %arg1 : i32, i32
  }
}

</mosaic_0001>

<llo_original>
// kernel: tpu_custom_call.1
$region0: #{tpu_custom_call.1}
  #allocation0 [shape = 'u32[]', space=smem, size = 0x4, offset = 0x4, fixed_abs, tag = 'smem constant byte address 0x4 - core index']
  #allocation1 [shape = 'u32[144,128]{1,0:T(1,128)}', space=vmem, size = 0x12000, scoped, tag = 'internal scratch']
  %s0 = inlined_call_operand.hbm [shape: f32[16,256], index: 0, kind: input, shape index: {}]
  %s1 = inlined_call_operand.hbm [shape: f32[16,256], index: 1, kind: input, shape index: {}]
  %s2 = inlined_call_operand.hbm [shape: f32[16,128], index: 2, kind: output, shape index: {}]
  %s3 = sld [smem:[#allocation0]]
  $region26: #{tpu_custom_call.1} parent=0
    _
  %s5 = ssub.s32 1, %s3
  %s6 = scalar_select 0, %s5, %s3
  $region1: #{tpu_custom_call.1} parent=0
    #allocation2 [shape = 'u8[8192]{0}', space=vmem, size = 0x2000, scoped, tag = 'input window, operand 0, single buffered']
    #allocation3 [shape = 's32[1]{0}', space=sflag, size = 0x4, scoped, tag = 'scoped memory for tpu_custom_call.1']
    #allocation4 [shape = 's32[1]{0}', space=sflag, size = 0x4, scoped, tag = 'scoped memory for tpu_custom_call.1']
    #allocation5 [shape = 'u8[8192]{0}', space=vmem, size = 0x2000, scoped, tag = 'input window, operand 1, single buffered']
    #allocation6 [shape = 's32[1]{0}', space=sflag, size = 0x4, scoped, tag = 'scoped memory for tpu_custom_call.1']
    #allocation7 [shape = 'u8[8192]{0}', space=vmem, size = 0x2000, scoped, tag = 'output window, operand 0, single buffered']
    %7 = vsyncpa [#allocation3], 0
    %8 = vsyncpa [#allocation6], 0
    %9 = vsyncpa [#allocation4], 0
    // Predicated region
    $region2: #{tpu_custom_call.1} parent=1 // pred_check
      _
    $region3: #{tpu_custom_call.1} parent=1 // pred_check_branch
      %11 = sbr.rel (0) target = $region5
    $region4: #{tpu_custom_call.1} parent=1 // pred_region
      %s13 = ssub.s32 256, 256
      %14 = vsyncadd [#allocation3], %s13
      %s15 = sshll.u32 [#allocation2], 4
      %s16 = int_to_ptr.vmem [resolvable:$true] %s15
      %21 = dma.hbm_to_vmem [thread:$0]  %s0, 256, %s16, [#allocation3], 256, 128, 8
    $region5: #{tpu_custom_call.1} parent=1 // pred_fallthru
      _
    // Predicated region
    $region6: #{tpu_custom_call.1} parent=1 // pred_check
      _
    $region7: #{tpu_custom_call.1} parent=1 // pred_check_branch
      %23 = sbr.rel (0) target = $region9
    $region8: #{tpu_custom_call.1} parent=1 // pred_region
      %s24 = sadd.s32 0, 1
      %s26 = ssub.s32 256, 256
      %27 = vsyncadd [#allocation6], %s26
      %s28 = smul.addr %s24, 128
      %s29 = scalar_lea.hbm %s1, %s28
      %s30 = sshll.u32 [#allocation5], 4
      %s31 = int_to_ptr.vmem [resolvable:$true] %s30
      %36 = dma.hbm_to_vmem [thread:$0]  %s29, 256, %s31, [#allocation6], 256, 128, 8
    $region9: #{tpu_custom_call.1} parent=1 // pred_fallthru
      _
    // Predicated region
    $region10: #{tpu_custom_call.1} parent=1 // pred_check
      _
    $region11: #{tpu_custom_call.1} parent=1 // pred_check_branch
      %38 = sbr.rel (0) target = $region13
    $region12: #{tpu_custom_call.1} parent=1 // pred_region
      %39 = dma.done [#allocation3], 256
    $region13: #{tpu_custom_call.1} parent=1 // pred_fallthru
      _
    // Predicated region
    $region14: #{tpu_custom_call.1} parent=1 // pred_check
      _
    $region15: #{tpu_custom_call.1} parent=1 // pred_check_branch
      %41 = sbr.rel (0) target = $region17
    $region16: #{tpu_custom_call.1} parent=1 // pred_region
      %42 = dma.done [#allocation6], 256
    $region17: #{tpu_custom_call.1} parent=1 // pred_fallthru
      _
    %s43 = sadd.s32 0, 1
    %v44 = vld [vmem:[#allocation2] sm:$0xff]
    %v45 = vld [vmem:[#allocation2 + $0x8] sm:$0xff]
    %v46 = vld [vmem:[#allocation5] sm:$0xff]
    %v47 = vld [vmem:[#allocation5 + $0x8] sm:$0xff]
    %v48 = vmul.f32 %v46, 0.5
    %v49 = vmul.f32 %v47, 0.5
    %v50 = vmul.f32 %v46, 0.70710677
    %v51 = vmul.f32 %v47, 0.70710677
    %v52 = verf.f32.pop %v50
    %v53 = verf.f32.pop %v51
    %v54 = vadd.f32 %v52, 1.0
    %v55 = vadd.f32 %v53, 1.0
    %v56 = vmul.f32 %v48, %v54
    %v57 = vmul.f32 %v49, %v55
    %v58 = vmul.f32 %v44, %v56
    %v59 = vmul.f32 %v45, %v57
    %60 = vst [vmem:[#allocation7] sm:$0xff] %v58
    %61 = vst [vmem:[#allocation7 + $0x8] sm:$0xff] %v59
    // Predicated region
    $region18: #{tpu_custom_call.1} parent=1 // pred_check
      _
    $region19: #{tpu_custom_call.1} parent=1 // pred_check_branch
      %63 = sbr.rel (0) target = $region21
    $region20: #{tpu_custom_call.1} parent=1 // pred_region
      %s65 = ssub.s32 256, 256
      %66 = vsyncadd [#allocation4], %s65
      %s67 = sshll.u32 [#allocation7], 4
      %s68 = int_to_ptr.vmem [resolvable:$true] %s67
      %73 = dma.vmem_to_hbm [thread:$0]  %s68, 256, %s2, [#allocation4], 128, 128, 8
    $region21: #{tpu_custom_call.1} parent=1 // pred_fallthru
      _
    // Predicated region
    $region22: #{tpu_custom_call.1} parent=1 // pred_check
      _
    $region23: #{tpu_custom_call.1} parent=1 // pred_check_branch
      %75 = sbr.rel (0) target = $region25
    $region24: #{tpu_custom_call.1} parent=1 // pred_region
      %76 = dma.done [#allocation4], 256
    $region25: #{tpu_custom_call.1} parent=1 // pred_fallthru
      _
    %77 = vsyncpa [#allocation3], 1
    %78 = vsyncpa [#allocation6], 1
    %79 = vsyncpa [#allocation4], 1

</llo_original>
